<compile_context>
chip_gen: v6e
topology: v6e:2x2x1
jax: 0.10.0
libtpu: 0.0.40
codegen_flags: <defaults>
</compile_context>

<pallas_src>
import functools

import jax
import jax.numpy as jnp
from jax import lax
from jax.experimental import pallas as pl
from jax.experimental.pallas import tpu as pltpu

LANES = 128
SUBL = 16                 # row-rounding unit (safe min-tile for f32 and bf16)
MAX_BLOCK_ROWS = 1024     # (1024, 128) f32 block = 512 KiB; ~86% of HBM roofline


def _round_up(a, b):
    return (a + b - 1) // b * b


def _pow_1m_pt(d, gamma):
    """d**gamma with integer-gamma special case (repeated multiply, no EUP)."""
    g = float(gamma)
    if g == int(g) and g >= 0.0:
        gi = int(g)
        if gi == 0:
            return jnp.ones_like(d)
        out = d
        for _ in range(gi - 1):
            out = out * d
        return out
    # NOTE: non-integer gamma with (1 - pt) < 0 yields NaN, same as PyTorch.
    return jnp.power(d, gamma)


def _focal_elementwise(x, t, alpha, gamma):
    # pt treats x as a probability, bce treats x as a logit -- this is exactly
    # what the reference PyTorch module does.
    pt = t * x + (1.0 - t) * (1.0 - x)
    bce = jnp.maximum(x, 0.0) - x * t + jnp.log1p(jnp.exp(-jnp.abs(x)))
    return alpha * _pow_1m_pt(1.0 - pt, gamma) * bce


def _focal_sum_kernel(x_ref, t_ref, out_ref, acc_ref, *, alpha, gamma,
                      n_valid, block_rows, blocks_per_split,
                      first_pad_block, has_tail):
    s = pl.program_id(0)          # parallel split (megacore on v7x)
    k = pl.program_id(1)          # reduction step

    @pl.when(k == 0)
    def _():
        acc_ref[...] = jnp.zeros_like(acc_ref)

    x = x_ref[...].astype(jnp.float32)
    t = t_ref[...].astype(jnp.float32)
    f = _focal_elementwise(x, t, alpha, gamma)

    if has_tail:
        block_idx = s * blocks_per_split + k

        @pl.when(block_idx >= first_pad_block)
        def _():
            row_i = lax.broadcasted_iota(jnp.int32, f.shape, 0)
            lane_i = lax.broadcasted_iota(jnp.int32, f.shape, 1)
            elem = (block_idx * block_rows + row_i) * LANES + lane_i
            acc_ref[...] += jnp.where(elem < n_valid, f, 0.0)

        @pl.when(block_idx < first_pad_block)
        def _():
            acc_ref[...] += f
    else:
        acc_ref[...] += f

    @pl.when(k == pl.num_programs(1) - 1)
    def _():
        # single cross-sublane reduction per split, done once at the end
        out_ref[...] = jnp.sum(acc_ref[...].reshape(-1, 8, LANES), axis=0)


def _focal_elem_kernel(x_ref, t_ref, o_ref, *, alpha, gamma):
    x = x_ref[...].astype(jnp.float32)
    t = t_ref[...].astype(jnp.float32)
    o_ref[...] = _focal_elementwise(x, t, alpha, gamma).astype(o_ref.dtype)


def _to_blocks(a, rows_padded):
    """Flatten to (rows_padded, 128); pad only if needed; keep native dtype."""
    flat = a.reshape(-1)
    pad = rows_padded * LANES - flat.size
    if pad:
        flat = jnp.pad(flat, (0, pad))
    return flat.reshape(rows_padded, LANES)


def focal_loss(inputs, targets, alpha=1.0, gamma=2.0, reduction="mean"):
    assert inputs.shape == targets.shape
    orig_shape = inputs.shape
    n = int(inputs.size)

    rows_needed = -(-n // LANES)
    block_rows = min(MAX_BLOCK_ROWS, _round_up(rows_needed, SUBL))
    n_blocks = -(-rows_needed // block_rows)

    if reduction in ("mean", "sum"):
        # Split the reduction over a leading "parallel" axis so both
        # TensorCores are used on v7x (harmless on single-core v5e/v6e).
        num_splits = 2 if n_blocks >= 2 else 1
        n_blocks = _round_up(n_blocks, num_splits)
        blocks_per_split = n_blocks // num_splits
        rows_padded = n_blocks * block_rows
        has_tail = rows_padded * LANES != n
        first_pad_block = n // (block_rows * LANES)

        x2 = _to_blocks(inputs, rows_padded)
        t2 = _to_blocks(targets, rows_padded)

        kern = functools.partial(
            _focal_sum_kernel, alpha=alpha, gamma=gamma, n_valid=n,
            block_rows=block_rows, blocks_per_split=blocks_per_split,
            first_pad_block=first_pad_block, has_tail=has_tail)

        partials = pl.pallas_call(
            kern,
            out_shape=jax.ShapeDtypeStruct((num_splits * 8, LANES),
                                           jnp.float32),
            grid_spec=pltpu.PrefetchScalarGridSpec(
                num_scalar_prefetch=0,
                grid=(num_splits, blocks_per_split),
                in_specs=[
                    pl.BlockSpec(
                        (block_rows, LANES),
                        lambda s, k, bps=blocks_per_split: (s * bps + k, 0)),
                    pl.BlockSpec(
                        (block_rows, LANES),
                        lambda s, k, bps=blocks_per_split: (s * bps + k, 0)),
                ],
                out_specs=pl.BlockSpec((8, LANES), lambda s, k: (s, 0)),
                scratch_shapes=[pltpu.VMEM((block_rows, LANES), jnp.float32)],
            ),
            compiler_params=pltpu.CompilerParams(
                dimension_semantics=("parallel", "arbitrary")),
        )(x2, t2)

        total = jnp.sum(partials)          # tiny (num_splits*8, 128) reduce
        if reduction == "mean":
            return total / jnp.float32(n)
        return total

    # reduction == 'none' -> per-element loss in the original shape
    rows_padded = n_blocks * block_rows
    x2 = _to_blocks(inputs, rows_padded)
    t2 = _to_blocks(targets, rows_padded)
    kern = functools.partial(_focal_elem_kernel, alpha=alpha, gamma=gamma)
    out2 = pl.pallas_call(
        kern,
        out_shape=jax.ShapeDtypeStruct((rows_padded, LANES), jnp.float32),
        grid_spec=pltpu.PrefetchScalarGridSpec(
            num_scalar_prefetch=0,
            grid=(n_blocks,),
            in_specs=[
                pl.BlockSpec((block_rows, LANES), lambda i: (i, 0)),
                pl.BlockSpec((block_rows, LANES), lambda i: (i, 0)),
            ],
            out_specs=pl.BlockSpec((block_rows, LANES), lambda i: (i, 0)),
        ),
        compiler_params=pltpu.CompilerParams(
            dimension_semantics=("parallel",)),
    )(x2, t2)
    return out2.reshape(-1)[:n].reshape(orig_shape)


def _focal_loss_ref(x, t, alpha=1.0, gamma=2.0, reduction="mean"):
    x = x.astype(jnp.float32)
    t = t.astype(jnp.float32)
    pt = t * x + (1.0 - t) * (1.0 - x)
    bce = jnp.maximum(x, 0.0) - x * t + jnp.log1p(jnp.exp(-jnp.abs(x)))
    fl = alpha * jnp.power(1.0 - pt, gamma) * bce
    if reduction == "mean":
        return fl.mean()
    if reduction == "sum":
        return fl.sum()
    return fl


if __name__ == "__main__":
    key = jax.random.PRNGKey(0)
    k1, k2, k3, k4 = jax.random.split(key, 4)

    # Small NCHW example consistent with the module's usage (inputs in (0,1)).
    x = jax.random.uniform(k1, (2, 4, 16, 16), dtype=jnp.float32)
    t = (jax.random.uniform(k2, (2, 4, 16, 16)) > 0.5).astype(jnp.float32)

    # mean
    out = jax.block_until_ready(focal_loss(x, t, 1.0, 2.0, "mean"))
    ref = _focal_loss_ref(x, t, 1.0, 2.0, "mean")
    assert jnp.allclose(out, ref, rtol=1e-5, atol=1e-6), (out, ref)

    # sum
    out = jax.block_until_ready(focal_loss(x, t, 1.0, 2.0, "sum"))
    ref = _focal_loss_ref(x, t, 1.0, 2.0, "sum")
    assert jnp.allclose(out, ref, rtol=1e-5, atol=1e-4), (out, ref)

    # none (elementwise)
    out = jax.block_until_ready(focal_loss(x, t, 1.0, 2.0, "none"))
    ref = _focal_loss_ref(x, t, 1.0, 2.0, "none")
    assert jnp.allclose(out, ref, rtol=1e-5, atol=1e-6)

    # non-integer gamma (exercises the jnp.power fallback)
    out = jax.block_until_ready(focal_loss(x, t, 0.5, 1.5, "mean"))
    ref = _focal_loss_ref(x, t, 0.5, 1.5, "mean")
    assert jnp.allclose(out, ref, rtol=1e-5, atol=1e-6), (out, ref)

    # ragged size (exercises in-kernel tail masking, not a multiple of 128)
    xr = jax.random.uniform(k3, (2, 3, 17, 19), dtype=jnp.float32)
    tr = (jax.random.uniform(k4, (2, 3, 17, 19)) > 0.5).astype(jnp.float32)
    out = jax.block_until_ready(focal_loss(xr, tr, 1.0, 2.0, "mean"))
    ref = _focal_loss_ref(xr, tr, 1.0, 2.0, "mean")
    assert jnp.allclose(out, ref, rtol=1e-4, atol=1e-5), (out, ref)

    print("KERNEL_OK")
</pallas_src>

<mosaic_0001>
module attributes {stable_mosaic.version = 11 : i64} {
  func.func @_focal_sum_kernel(%arg0: i32, %arg1: i32, %arg2: memref<16x128xf32, #tpu.memory_space<vmem>>, %arg3: memref<16x128xf32, #tpu.memory_space<vmem>>, %arg4: memref<8x128xf32, #tpu.memory_space<vmem>>, %arg5: memref<16x128xf32, #tpu.memory_space<vmem>>) attributes {dimension_semantics = [#tpu.dimension_semantics<parallel>, #tpu.dimension_semantics<arbitrary>], iteration_bounds = array<i64: 1, 1>, scalar_prefetch = 0 : i64, scratch_operands = 1 : i64, tpu.core_type = #tpu.core_type<tc>, window_params = [{transform_indices = @transform_0, window_bounds = array<i64: 16, 128>}, {transform_indices = @transform_1, window_bounds = array<i64: 16, 128>}, {transform_indices = @transform_2, window_bounds = array<i64: 8, 128>}]} {
    %c0_i32 = arith.constant 0 : i32
    %0 = arith.cmpi eq, %arg1, %c0_i32 : i32
    %1 = arith.extui %0 : i1 to i32
    %c0_i32_0 = arith.constant 0 : i32
    %2 = arith.cmpi ne, %1, %c0_i32_0 : i32
    scf.if %2 {
      %cst_15 = arith.constant 0.000000e+00 : f32
      %34 = vector.broadcast %cst_15 : f32 to vector<16x128xf32>
      %c0_16 = arith.constant 0 : index
      %c0_17 = arith.constant 0 : index
      %35 = vector.load %arg5[%c0_16, %c0_17] : memref<16x128xf32, #tpu.memory_space<vmem>>, vector<16x128xf32>
      tpu.vector_store %arg5[%c0_16, %c0_17], %34 {strides = array<i32>} : memref<16x128xf32, #tpu.memory_space<vmem>>, vector<16x128xf32>,
    } else {
    }
    %c0 = arith.constant 0 : index
    %c0_1 = arith.constant 0 : index
    %3 = vector.load %arg2[%c0, %c0_1] : memref<16x128xf32, #tpu.memory_space<vmem>>, vector<16x128xf32>
    %c0_2 = arith.constant 0 : index
    %c0_3 = arith.constant 0 : index
    %4 = vector.load %arg3[%c0_2, %c0_3] : memref<16x128xf32, #tpu.memory_space<vmem>>, vector<16x128xf32>
    %5 = arith.mulf %4, %3 : vector<16x128xf32>
    %cst = arith.constant 1.000000e+00 : f32
    %6 = vector.broadcast %cst : f32 to vector<16x128xf32>
    %7 = arith.subf %6, %4 : vector<16x128xf32>
    %cst_4 = arith.constant 1.000000e+00 : f32
    %8 = vector.broadcast %cst_4 : f32 to vector<16x128xf32>
    %9 = arith.subf %8, %3 : vector<16x128xf32>
    %10 = arith.mulf %7, %9 : vector<16x128xf32>
    %11 = arith.addf %5, %10 : vector<16x128xf32>
    %cst_5 = arith.constant 0.000000e+00 : f32
    %12 = vector.broadcast %cst_5 : f32 to vector<16x128xf32>
    %13 = arith.maximumf %3, %12 : vector<16x128xf32>
    %14 = arith.mulf %3, %4 : vector<16x128xf32>
    %15 = arith.subf %13, %14 : vector<16x128xf32>
    %16 = math.absf %3 : vector<16x128xf32>
    %cst_6 = arith.constant 0.000000e+00 : f32
    %17 = vector.broadcast %cst_6 : f32 to vector<16x128xf32>
    %18 = arith.subf %17, %16 : vector<16x128xf32>
    %19 = math.exp %18 : vector<16x128xf32>
    %20 = math.log1p %19 : vector<16x128xf32>
    %21 = arith.addf %15, %20 : vector<16x128xf32>
    %cst_7 = arith.constant 1.000000e+00 : f32
    %22 = vector.broadcast %cst_7 : f32 to vector<16x128xf32>
    %23 = arith.subf %22, %11 : vector<16x128xf32>
    %24 = arith.mulf %23, %23 : vector<16x128xf32>
    %cst_8 = arith.constant 1.000000e+00 : f32
    %25 = vector.broadcast %cst_8 : f32 to vector<16x128xf32>
    %26 = arith.mulf %25, %24 : vector<16x128xf32>
    %27 = arith.mulf %26, %21 : vector<16x128xf32>
    %c0_9 = arith.constant 0 : index
    %c0_10 = arith.constant 0 : index
    %28 = vector.load %arg5[%c0_9, %c0_10] : memref<16x128xf32, #tpu.memory_space<vmem>>, vector<16x128xf32>
    %29 = arith.addf %28, %27 : vector<16x128xf32>
    %c0_11 = arith.constant 0 : index
    %c0_12 = arith.constant 0 : index
    %30 = vector.load %arg5[%c0_11, %c0_12] : memref<16x128xf32, #tpu.memory_space<vmem>>, vector<16x128xf32>
    tpu.vector_store %arg5[%c0_11, %c0_12], %29 {strides = array<i32>} : memref<16x128xf32, #tpu.memory_space<vmem>>, vector<16x128xf32>,
    %c0_i32_13 = arith.constant 0 : i32
    %31 = arith.cmpi eq, %arg1, %c0_i32_13 : i32
    %32 = arith.extui %31 : i1 to i32
    %c0_i32_14 = arith.constant 0 : i32
    %33 = arith.cmpi ne, %32, %c0_i32_14 : i32
    scf.if %33 {
      %c0_15 = arith.constant 0 : index
      %c0_16 = arith.constant 0 : index
      %34 = vector.load %arg5[%c0_15, %c0_16] : memref<16x128xf32, #tpu.memory_space<vmem>>, vector<16x128xf32>
      %35 = vector.shape_cast %34 : vector<16x128xf32> to vector<2x8x128xf32>
      %cst_17 = arith.constant dense<0.000000e+00> : vector<8x128xf32>
      %36 = vector.multi_reduction <add>, %35, %cst_17 [0] : vector<2x8x128xf32> to vector<8x128xf32>
      %c0_18 = arith.constant 0 : index
      %c0_19 = arith.constant 0 : index
      %37 = vector.load %arg4[%c0_18, %c0_19] : memref<8x128xf32, #tpu.memory_space<vmem>>, vector<8x128xf32>
      tpu.vector_store %arg4[%c0_18, %c0_19], %36 {strides = array<i32>} : memref<8x128xf32, #tpu.memory_space<vmem>>, vector<8x128xf32>,
    } else {
    }
    return
  }
  func.func @transform_0(%arg0: i32, %arg1: i32) -> (i32, i32) {
    %c1_i32 = arith.constant 1 : i32
    %0 = arith.muli %arg0, %c1_i32 : i32
    %1 = arith.addi %0, %arg1 : i32
    %c0_i32 = arith.constant 0 : i32
    %c0_i32_0 = arith.constant 0 : i32
    return %1, %c0_i32 : i32, i32
  }
  func.func @transform_1(%arg0: i32, %arg1: i32) -> (i32, i32) {
    %c1_i32 = arith.constant 1 : i32
    %0 = arith.muli %arg0, %c1_i32 : i32
    %1 = arith.addi %0, %arg1 : i32
    %c0_i32 = arith.constant 0 : i32
    %c0_i32_0 = arith.constant 0 : i32
    return %1, %c0_i32 : i32, i32
  }
  func.func @transform_2(%arg0: i32, %arg1: i32) -> (i32, i32) {
    %c0_i32 = arith.constant 0 : i32
    %c0_i32_0 = arith.constant 0 : i32
    return %arg0, %c0_i32 : i32, i32
  }
}

</mosaic_0001>

<llo_original>
// kernel: tpu_custom_call.1
$region0: #{tpu_custom_call.1}
  #allocation0 [shape = 'u32[]', space=smem, size = 0x4, offset = 0x4, fixed_abs, tag = 'smem constant byte address 0x4 - core index']
  #allocation1 [shape = 'u32[144,128]{1,0:T(1,128)}', space=vmem, size = 0x12000, scoped, tag = 'internal scratch']
  #allocation2 [shape = 'f32[16,128]{1,0:T(8,128)}', space=vmem, size = 0x2000, scoped, tag = 'scratch operand']
  %s0 = inlined_call_operand.hbm [shape: f32[16,128], index: 0, kind: input, shape index: {}]
  %s1 = inlined_call_operand.hbm [shape: f32[16,128], index: 1, kind: input, shape index: {}]
  %s2 = inlined_call_operand.hbm [shape: f32[8,128], index: 2, kind: output, shape index: {}]
  %s3 = sld [smem:[#allocation0]]
  $region34: #{tpu_custom_call.1} parent=0
    _
  %s5 = ssub.s32 1, %s3
  %s6 = scalar_select 0, %s5, %s3
  $region1: #{tpu_custom_call.1} parent=0
    #allocation3 [shape = 'u8[8192]{0}', space=vmem, size = 0x2000, scoped, tag = 'input window, operand 0, single buffered']
    #allocation4 [shape = 's32[1]{0}', space=sflag, size = 0x4, scoped, tag = 'scoped memory for tpu_custom_call.1']
    #allocation5 [shape = 's32[1]{0}', space=sflag, size = 0x4, scoped, tag = 'scoped memory for tpu_custom_call.1']
    #allocation6 [shape = 'u8[8192]{0}', space=vmem, size = 0x2000, scoped, tag = 'input window, operand 1, single buffered']
    #allocation7 [shape = 's32[1]{0}', space=sflag, size = 0x4, scoped, tag = 'scoped memory for tpu_custom_call.1']
    #allocation8 [shape = 'u8[4096]{0}', space=vmem, size = 0x1000, scoped, tag = 'output window, operand 0, single buffered']
    %7 = vsyncpa [#allocation4], 0
    %8 = vsyncpa [#allocation7], 0
    %9 = vsyncpa [#allocation5], 0
    // Predicated region
    $region2: #{tpu_custom_call.1} parent=1 // pred_check
      _
    $region3: #{tpu_custom_call.1} parent=1 // pred_check_branch
      %11 = sbr.rel (0) target = $region5
    $region4: #{tpu_custom_call.1} parent=1 // pred_region
      %s12 = sadd.s32 0, 0
      %s13 = smul.u32 2, %s12
      %s15 = ssub.s32 256, 256
      %16 = vsyncadd [#allocation4], %s15
      %s17 = smul.addr %s13, 128
      %s18 = scalar_lea.hbm %s0, %s17
      %s19 = sshll.u32 [#allocation3], 4
      %s20 = int_to_ptr.vmem [resolvable:$true] %s19
      %25 = dma.hbm_to_vmem [thread:$0]  %s18, 256, %s20, [#allocation4], 128, 128, 8
    $region5: #{tpu_custom_call.1} parent=1 // pred_fallthru
      _
    // Predicated region
    $region6: #{tpu_custom_call.1} parent=1 // pred_check
      _
    $region7: #{tpu_custom_call.1} parent=1 // pred_check_branch
      %27 = sbr.rel (0) target = $region9
    $region8: #{tpu_custom_call.1} parent=1 // pred_region
      %s28 = sadd.s32 0, 0
      %s29 = smul.u32 2, %s28
      %s31 = ssub.s32 256, 256
      %32 = vsyncadd [#allocation7], %s31
      %s33 = smul.addr %s29, 128
      %s34 = scalar_lea.hbm %s1, %s33
      %s35 = sshll.u32 [#allocation6], 4
      %s36 = int_to_ptr.vmem [resolvable:$true] %s35
      %41 = dma.hbm_to_vmem [thread:$0]  %s34, 256, %s36, [#allocation7], 128, 128, 8
    $region9: #{tpu_custom_call.1} parent=1 // pred_fallthru
      _
    // Predicated region
    $region10: #{tpu_custom_call.1} parent=1 // pred_check
      _
    $region11: #{tpu_custom_call.1} parent=1 // pred_check_branch
      %43 = sbr.rel (0) target = $region13
    $region12: #{tpu_custom_call.1} parent=1 // pred_region
      %44 = dma.done [#allocation4], 256
    $region13: #{tpu_custom_call.1} parent=1 // pred_fallthru
      _
    // Predicated region
    $region14: #{tpu_custom_call.1} parent=1 // pred_check
      _
    $region15: #{tpu_custom_call.1} parent=1 // pred_check_branch
      %46 = sbr.rel (0) target = $region17
    $region16: #{tpu_custom_call.1} parent=1 // pred_region
      %47 = dma.done [#allocation7], 256
    $region17: #{tpu_custom_call.1} parent=1 // pred_fallthru
      _
    %s48 = sadd.s32 0, 0
    %s49 = smul.u32 2, %s48
    %s50 = sadd.s32 0, 0
    %s51 = smul.u32 2, %s50
    %p52 = scmp.eq.s32.totalorder 0, 0
    // Predicated region
    $region18: #{tpu_custom_call.1} parent=1 // pred_check
      %p53 = pneg %p52
    $region19: #{tpu_custom_call.1} parent=1 // pred_check_branch
      %55 = sbr.rel (%p53) target = $region21
    $region20: #{tpu_custom_call.1} parent=1 // pred_region
      %56 = vst [vmem:[#allocation2] sm:$0xff] 0.0
      %57 = vst [vmem:[#allocation2 + $0x8] sm:$0xff] 0.0
    $region21: #{tpu_custom_call.1} parent=1 // pred_fallthru
      _
    %v58 = vld [vmem:[#allocation3] sm:$0xff]
    %v59 = vld [vmem:[#allocation3 + $0x8] sm:$0xff]
    %v60 = vld [vmem:[#allocation6] sm:$0xff]
    %v61 = vld [vmem:[#allocation6 + $0x8] sm:$0xff]
    %v62 = vmul.f32 %v60, %v58
    %v63 = vmul.f32 %v61, %v59
    %v64 = vsub.f32 1.0, %v60
    %v65 = vsub.f32 1.0, %v61
    %v66 = vsub.f32 1.0, %v58
    %v67 = vsub.f32 1.0, %v59
    %v68 = vmul.f32 %v64, %v66
    %v69 = vmul.f32 %v65, %v67
    %v70 = vadd.f32 %v62, %v68
    %v71 = vadd.f32 %v63, %v69
    %v72 = vmax.f32 %v58, 0.0
    %v73 = vmax.f32 %v59, 0.0
    %v74 = vsub.f32 %v72, %v62
    %v75 = vsub.f32 %v73, %v63
    %v76 = vand.u32 2147483647, %v58
    %v77 = vand.u32 2147483647, %v59
    %v78 = vsub.f32 0.0, %v76
    %v79 = vsub.f32 0.0, %v77
    %v80 = vmul.f32 %v78, 1.442695
    %v81 = vpow.pop %v80
    %v82 = vmul.f32 %v79, 1.442695
    %v83 = vpow.pop %v82
    %v84 = vadd.f32 %v81, 1.0
    %v85 = vlog2.pop %v84
    %v86 = vmul.f32 %v85, 0.6931472
    %v87 = vmul.f32 -0.5, %v81
    %v88 = vadd.f32 %v87, 1.0
    %v89 = vmul.f32 %v88, %v81
    %v90 = vand.u32 2147483647, %v81
    %vm91 = vcmp.lt.f32.partialorder %v90, 0.0004427343
    %v92 = vsel %vm91, %v89, %v86
    %v93 = vadd.f32 %v83, 1.0
    %v94 = vlog2.pop %v93
    %v95 = vmul.f32 %v94, 0.6931472
    %v96 = vmul.f32 -0.5, %v83
    %v97 = vadd.f32 %v96, 1.0
    %v98 = vmul.f32 %v97, %v83
    %v99 = vand.u32 2147483647, %v83
    %vm100 = vcmp.lt.f32.partialorder %v99, 0.0004427343
    %v101 = vsel %vm100, %v98, %v95
    %v102 = vadd.f32 %v74, %v92
    %v103 = vadd.f32 %v75, %v101
    %v104 = vsub.f32 1.0, %v70
    %v105 = vsub.f32 1.0, %v71
    %v106 = vmul.f32 %v104, %v104
    %v107 = vmul.f32 %v105, %v105
    %v108 = vmul.f32 %v106, %v102
    %v109 = vmul.f32 %v107, %v103
    %v110 = vld [vmem:[#allocation2] sm:$0xff]
    %v111 = vld [vmem:[#allocation2 + $0x8] sm:$0xff]
    %v112 = vadd.f32 %v110, %v108
    %v113 = vadd.f32 %v111, %v109
    %114 = vst [vmem:[#allocation2] sm:$0xff] %v112
    %115 = vst [vmem:[#allocation2 + $0x8] sm:$0xff] %v113
    // Predicated region
    $region22: #{tpu_custom_call.1} parent=1 // pred_check
      %p116 = pneg %p52
    $region23: #{tpu_custom_call.1} parent=1 // pred_check_branch
      %118 = sbr.rel (%p116) target = $region25
    $region24: #{tpu_custom_call.1} parent=1 // pred_region
      %v119 = vld [vmem:[#allocation2] sm:$0xff]
      %v120 = vld [vmem:[#allocation2 + $0x8] sm:$0xff]
      %v121 = vadd.f32 %v119, %v120
      %122 = vst [vmem:[#allocation8] sm:$0xff] %v121
    $region25: #{tpu_custom_call.1} parent=1 // pred_fallthru
      _
    // Predicated region
    $region26: #{tpu_custom_call.1} parent=1 // pred_check
      _
    $region27: #{tpu_custom_call.1} parent=1 // pred_check_branch
      %124 = sbr.rel (0) target = $region29
    $region28: #{tpu_custom_call.1} parent=1 // pred_region
      %s126 = ssub.s32 128, 128
      %127 = vsyncadd [#allocation5], %s126
      %s129 = sshll.u32 [#allocation8], 4
      %s130 = int_to_ptr.vmem [resolvable:$true] %s129
      %132 = dma.vmem_to_hbm [thread:$0]  %s130, 128, %s2, [#allocation5]
    $region29: #{tpu_custom_call.1} parent=1 // pred_fallthru
      _
    // Predicated region
    $region30: #{tpu_custom_call.1} parent=1 // pred_check
      _
    $region31: #{tpu_custom_call.1} parent=1 // pred_check_branch
      %134 = sbr.rel (0) target = $region33
    $region32: #{tpu_custom_call.1} parent=1 // pred_region
      %135 = dma.done [#allocation5], 128
    $region33: #{tpu_custom_call.1} parent=1 // pred_fallthru
      _
    %136 = vsyncpa [#allocation4], 1
    %137 = vsyncpa [#allocation7], 1
    %138 = vsyncpa [#allocation5], 1

</llo_original>
